<compile_context>
chip_gen: v6e
topology: v6e:2x2x1
jax: 0.10.0
libtpu: 0.0.40
codegen_flags: <defaults>
</compile_context>

<pallas_src>
import functools

import jax
import jax.numpy as jnp
from jax.experimental import pallas as pl
from jax.experimental.pallas import tpu as pltpu


def nnet_kernel(x_ref,
                w1_ref, b1_ref,
                w2_ref, b2_ref,
                w3_ref, b3_ref,
                w4_ref, b4_ref,
                o_ref):
    # Streamed x tile: [TB, F] f32 -> bf16 for the MXU (in-kernel cast).
    x = x_ref[...].astype(jnp.bfloat16)

    # Layer 1: [50, F] x [TB, F]^T -> [50, TB]  (trans-B contraction).
    # NOTE: verify in the Mosaic dump (pl.lower_as_mlir, grep vxpose/vmatmul)
    # that this does not relayout the whole x tile through the XLU; if it
    # does, force the W-moving orientation with explicit MXU driving.
    h = jax.lax.dot_general(
        w1_ref[...], x, (((1,), (1,)), ((), ())),
        preferred_element_type=jnp.float32)
    h = jnp.maximum(h + b1_ref[...], 0.0).astype(jnp.bfloat16)

    # Layer 2: [50, 50] x [50, TB] -> [50, TB]  (tiny W is the moving operand)
    h = jnp.dot(w2_ref[...], h, preferred_element_type=jnp.float32)
    h = jnp.maximum(h + b2_ref[...], 0.0).astype(jnp.bfloat16)

    # Layer 3: [25, 50] x [50, TB] -> [25, TB]  (kept in f32 for layer 4)
    h = jnp.dot(w3_ref[...], h, preferred_element_type=jnp.float32)
    h = jnp.maximum(h + b3_ref[...], 0.0)

    # Layer 4 off the MXU: z[1, TB] = sum_k w4[k] * h[k, :] + b4
    # (VPU broadcast-multiply + XLU sublane reduction; MXU stays free).
    z = jnp.sum(h * w4_ref[...], axis=0, keepdims=True) + b4_ref[...]

    # Exact sigmoid: denominator >= 1 -> result in [0, 1]; exp overflow to
    # +inf for very negative z yields exactly 0 (no NaN).
    o_ref[...] = 1.0 / (1.0 + jnp.exp(-z))


def _round_up(n, m):
    return (n + m - 1) // m * m


def _choose_tb(batch, tb_max):
    """Batch tile: multiple of 128 (lane-dense (1, tb) output blocks), as
    large as tb_max, but capped near B/4 for big batches so the 'parallel'
    grid axis keeps both v7x TensorCores busy."""
    tb_max = max(128, _round_up(tb_max, 128))
    tb = max(128, min(tb_max, _round_up(batch, 128)))
    quarter = (batch // 4) // 128 * 128
    if quarter >= 1024:          # only split once the per-core tiles stay big
        tb = min(tb, quarter)
    return tb


def prepare_params(params):
    """One-time conversion (outside the per-call path). Weights for layers
    1-3 stay in the PyTorch [out, in] layout, cast to bf16; biases become
    f32 column vectors [out, 1] for lane-broadcast. Layer 4 runs on the
    VPU/XLU in f32: column-vector weight [25, 1] and scalar bias [1, 1]."""
    prep = {}
    for i in (1, 2, 3):
        prep[f"w{i}"] = params[f"w{i}"].astype(jnp.bfloat16)
        prep[f"b{i}"] = params[f"b{i}"].astype(jnp.float32).reshape(-1, 1)
    prep["w4"] = params["w4"].astype(jnp.float32).reshape(-1, 1)   # [25, 1]
    prep["b4"] = params["b4"].astype(jnp.float32).reshape(1, 1)    # [1, 1]
    return prep


@functools.partial(jax.jit, static_argnames=("tb_max",))
def nnet_forward(x, prep, *, tb_max=4096):
    """x: [B, n_feats] float32.  prep: output of prepare_params."""
    x = x.astype(jnp.float32)
    B, F = x.shape

    tb = _choose_tb(B, tb_max)
    grid = (pl.cdiv(B, tb),)        # ragged last tile; no pad/cast pre-pass

    w1, b1 = prep["w1"], prep["b1"]
    w2, b2 = prep["w2"], prep["b2"]
    w3, b3 = prep["w3"], prep["b3"]
    w4, b4 = prep["w4"], prep["b4"]

    # Weights/biases: full-shape block, constant block index -> DMA'd once,
    # resident in VMEM across all batch tiles.
    def resident(a):
        return pl.BlockSpec(a.shape, lambda i: (0,) * a.ndim)

    out = pl.pallas_call(
        nnet_kernel,
        out_shape=jax.ShapeDtypeStruct((1, B), jnp.float32),
        grid=grid,
        in_specs=[
            pl.BlockSpec((tb, F), lambda i: (i, 0)),   # streamed x tiles
            resident(w1), resident(b1),
            resident(w2), resident(b2),
            resident(w3), resident(b3),
            resident(w4), resident(b4),
        ],
        out_specs=pl.BlockSpec((1, tb), lambda i: (0, i)),  # lane-dense out
        compiler_params=pltpu.CompilerParams(
            dimension_semantics=("parallel",),          # megacore sharding
            vmem_limit_bytes=32 * 1024 * 1024),         # v5e headroom
    )(x, w1, b1, w2, b2, w3, b3, w4, b4)

    return out.reshape(B, 1)


def nnet_reference(x, params):
    """Pure-JAX f32 reference matching the PyTorch forward."""
    h = jax.nn.relu(x @ params["w1"].T + params["b1"])
    h = jax.nn.relu(h @ params["w2"].T + params["b2"])
    h = jax.nn.relu(h @ params["w3"].T + params["b3"])
    return jax.nn.sigmoid(h @ params["w4"].T + params["b4"]).reshape(-1, 1)


def init_params(key, n_feats=25):
    """Deterministic init matching nn.Linear shapes (weight: [out, in])."""
    dims = [(50, n_feats), (50, 50), (25, 50), (1, 25)]
    params = {}
    for i, (out_d, in_d) in enumerate(dims, start=1):
        key, kw, kb = jax.random.split(key, 3)
        bound = 1.0 / jnp.sqrt(in_d)
        params[f"w{i}"] = jax.random.uniform(
            kw, (out_d, in_d), jnp.float32, -bound, bound)
        params[f"b{i}"] = jax.random.uniform(
            kb, (out_d,), jnp.float32, -bound, bound)
    return params


if __name__ == "__main__":
    key = jax.random.PRNGKey(0)
    key, kx, kx2 = jax.random.split(key, 3)

    n_feats = 25
    params = init_params(key, n_feats=n_feats)
    prep = prepare_params(params)

    # Small batch (single ragged tile, block bigger than the array).
    batch = 8
    x = jax.random.normal(kx, (batch, n_feats), dtype=jnp.float32)
    y = nnet_forward(x, prep)
    jax.block_until_ready(y)
    assert y.shape == (batch, 1)
    assert bool(jnp.all((y >= 0.0) & (y <= 1.0)))
    y_ref = nnet_reference(x, params)
    assert bool(jnp.max(jnp.abs(y - y_ref)) < 5e-2), "mismatch vs reference"

    # Larger, non-multiple-of-tile batch: exercises the multi-step pipelined
    # grid, ragged last tile, and VMEM-resident weights.
    batch2 = 4100
    x2 = jax.random.normal(kx2, (batch2, n_feats), dtype=jnp.float32)
    y2 = nnet_forward(x2, prep)
    jax.block_until_ready(y2)
    assert y2.shape == (batch2, 1)
    assert bool(jnp.all((y2 >= 0.0) & (y2 <= 1.0)))
    y2_ref = nnet_reference(x2, params)
    assert bool(jnp.max(jnp.abs(y2 - y2_ref)) < 5e-2), "mismatch vs reference"

    print("KERNEL_OK")
</pallas_src>

<mosaic_0001>
module attributes {stable_mosaic.version = 11 : i64} {
  func.func @nnet_kernel(%arg0: i32, %arg1: memref<128x25xf32, #tpu.memory_space<vmem>>, %arg2: memref<50x25xbf16, #tpu.memory_space<vmem>>, %arg3: memref<50x1xf32, #tpu.memory_space<vmem>>, %arg4: memref<50x50xbf16, #tpu.memory_space<vmem>>, %arg5: memref<50x1xf32, #tpu.memory_space<vmem>>, %arg6: memref<25x50xbf16, #tpu.memory_space<vmem>>, %arg7: memref<25x1xf32, #tpu.memory_space<vmem>>, %arg8: memref<25x1xf32, #tpu.memory_space<vmem>>, %arg9: memref<1x1xf32, #tpu.memory_space<vmem>>, %arg10: memref<1x128xf32, #tpu.memory_space<vmem>>) attributes {dimension_semantics = [#tpu.dimension_semantics<parallel>], iteration_bounds = array<i64: 1>, scalar_prefetch = 0 : i64, scratch_operands = 0 : i64, tpu.core_type = #tpu.core_type<tc>, window_params = [{transform_indices = @transform_0, window_bounds = array<i64: 128, 25>}, {pipeline_mode = #tpu.pipeline_mode<synchronous>, transform_indices = @transform_1, window_bounds = array<i64: 50, 25>}, {pipeline_mode = #tpu.pipeline_mode<synchronous>, transform_indices = @transform_2, window_bounds = array<i64: 50, 1>}, {pipeline_mode = #tpu.pipeline_mode<synchronous>, transform_indices = @transform_3, window_bounds = array<i64: 50, 50>}, {pipeline_mode = #tpu.pipeline_mode<synchronous>, transform_indices = @transform_4, window_bounds = array<i64: 50, 1>}, {pipeline_mode = #tpu.pipeline_mode<synchronous>, transform_indices = @transform_5, window_bounds = array<i64: 25, 50>}, {pipeline_mode = #tpu.pipeline_mode<synchronous>, transform_indices = @transform_6, window_bounds = array<i64: 25, 1>}, {pipeline_mode = #tpu.pipeline_mode<synchronous>, transform_indices = @transform_7, window_bounds = array<i64: 25, 1>}, {pipeline_mode = #tpu.pipeline_mode<synchronous>, transform_indices = @transform_8, window_bounds = array<i64: 1, 1>}, {transform_indices = @transform_9, window_bounds = array<i64: 1, 128>}]} {
    %c0 = arith.constant 0 : index
    %c0_0 = arith.constant 0 : index
    %0 = vector.load %arg1[%c0, %c0_0] : memref<128x25xf32, #tpu.memory_space<vmem>>, vector<128x25xf32>
    %1 = arith.truncf %0 : vector<128x25xf32> to vector<128x25xbf16>
    %c0_1 = arith.constant 0 : index
    %c0_2 = arith.constant 0 : index
    %2 = vector.load %arg2[%c0_1, %c0_2] : memref<50x25xbf16, #tpu.memory_space<vmem>>, vector<50x25xbf16>
    %cst = arith.constant dense<0.000000e+00> : vector<50x128xf32>
    %3 = tpu.matmul %2, %1, %cst {dimension_numbers = #tpu.dot_dimension_numbers<[1], [1], [0], [0], [0, 0, 1, 0], [], []>} : vector<50x25xbf16>, vector<128x25xbf16>, vector<50x128xf32> -> vector<50x128xf32>
    %c0_3 = arith.constant 0 : index
    %c0_4 = arith.constant 0 : index
    %4 = vector.load %arg3[%c0_3, %c0_4] : memref<50x1xf32, #tpu.memory_space<vmem>>, vector<50x1xf32>
    %5 = vector.broadcast %4 : vector<50x1xf32> to vector<50x128xf32>
    %6 = arith.addf %3, %5 : vector<50x128xf32>
    %cst_5 = arith.constant 0.000000e+00 : f32
    %7 = vector.broadcast %cst_5 : f32 to vector<50x128xf32>
    %8 = arith.maximumf %6, %7 : vector<50x128xf32>
    %9 = arith.truncf %8 : vector<50x128xf32> to vector<50x128xbf16>
    %c0_6 = arith.constant 0 : index
    %c0_7 = arith.constant 0 : index
    %10 = vector.load %arg4[%c0_6, %c0_7] : memref<50x50xbf16, #tpu.memory_space<vmem>>, vector<50x50xbf16>
    %cst_8 = arith.constant dense<0.000000e+00> : vector<50x128xf32>
    %11 = tpu.matmul %10, %9, %cst_8 {dimension_numbers = #tpu.dot_dimension_numbers<[1], [0], [0], [1], [0, 0, 1, 1], [], []>} : vector<50x50xbf16>, vector<50x128xbf16>, vector<50x128xf32> -> vector<50x128xf32>
    %c0_9 = arith.constant 0 : index
    %c0_10 = arith.constant 0 : index
    %12 = vector.load %arg5[%c0_9, %c0_10] : memref<50x1xf32, #tpu.memory_space<vmem>>, vector<50x1xf32>
    %13 = vector.broadcast %12 : vector<50x1xf32> to vector<50x128xf32>
    %14 = arith.addf %11, %13 : vector<50x128xf32>
    %cst_11 = arith.constant 0.000000e+00 : f32
    %15 = vector.broadcast %cst_11 : f32 to vector<50x128xf32>
    %16 = arith.maximumf %14, %15 : vector<50x128xf32>
    %17 = arith.truncf %16 : vector<50x128xf32> to vector<50x128xbf16>
    %c0_12 = arith.constant 0 : index
    %c0_13 = arith.constant 0 : index
    %18 = vector.load %arg6[%c0_12, %c0_13] : memref<25x50xbf16, #tpu.memory_space<vmem>>, vector<25x50xbf16>
    %cst_14 = arith.constant dense<0.000000e+00> : vector<25x128xf32>
    %19 = tpu.matmul %18, %17, %cst_14 {dimension_numbers = #tpu.dot_dimension_numbers<[1], [0], [0], [1], [0, 0, 1, 1], [], []>} : vector<25x50xbf16>, vector<50x128xbf16>, vector<25x128xf32> -> vector<25x128xf32>
    %c0_15 = arith.constant 0 : index
    %c0_16 = arith.constant 0 : index
    %20 = vector.load %arg7[%c0_15, %c0_16] : memref<25x1xf32, #tpu.memory_space<vmem>>, vector<25x1xf32>
    %21 = vector.broadcast %20 : vector<25x1xf32> to vector<25x128xf32>
    %22 = arith.addf %19, %21 : vector<25x128xf32>
    %cst_17 = arith.constant 0.000000e+00 : f32
    %23 = vector.broadcast %cst_17 : f32 to vector<25x128xf32>
    %24 = arith.maximumf %22, %23 : vector<25x128xf32>
    %c0_18 = arith.constant 0 : index
    %c0_19 = arith.constant 0 : index
    %25 = vector.load %arg8[%c0_18, %c0_19] : memref<25x1xf32, #tpu.memory_space<vmem>>, vector<25x1xf32>
    %26 = vector.broadcast %25 : vector<25x1xf32> to vector<25x128xf32>
    %27 = arith.mulf %24, %26 : vector<25x128xf32>
    %cst_20 = arith.constant dense<0.000000e+00> : vector<128xf32>
    %28 = vector.multi_reduction <add>, %27, %cst_20 [0] : vector<25x128xf32> to vector<128xf32>
    %29 = vector.shape_cast %28 : vector<128xf32> to vector<1x128xf32>
    %c0_21 = arith.constant 0 : index
    %c0_22 = arith.constant 0 : index
    %30 = vector.load %arg9[%c0_21, %c0_22] : memref<1x1xf32, #tpu.memory_space<vmem>>, vector<1x1xf32>
    %31 = vector.broadcast %30 : vector<1x1xf32> to vector<1x128xf32>
    %32 = arith.addf %29, %31 : vector<1x128xf32>
    %cst_23 = arith.constant 0.000000e+00 : f32
    %33 = vector.broadcast %cst_23 : f32 to vector<1x128xf32>
    %34 = arith.subf %33, %32 : vector<1x128xf32>
    %35 = math.exp %34 : vector<1x128xf32>
    %cst_24 = arith.constant 1.000000e+00 : f32
    %36 = vector.broadcast %cst_24 : f32 to vector<1x128xf32>
    %37 = arith.addf %36, %35 : vector<1x128xf32>
    %cst_25 = arith.constant 1.000000e+00 : f32
    %38 = vector.broadcast %cst_25 : f32 to vector<1x128xf32>
    %39 = arith.divf %38, %37 : vector<1x128xf32>
    %c0_26 = arith.constant 0 : index
    %c0_27 = arith.constant 0 : index
    %40 = vector.load %arg10[%c0_26, %c0_27] : memref<1x128xf32, #tpu.memory_space<vmem>>, vector<1x128xf32>
    tpu.vector_store %arg10[%c0_26, %c0_27], %39 {strides = array<i32>} : memref<1x128xf32, #tpu.memory_space<vmem>>, vector<1x128xf32>,
    return
  }
  func.func @transform_0(%arg0: i32) -> (i32, i32) {
    %c0_i32 = arith.constant 0 : i32
    %c0_i32_0 = arith.constant 0 : i32
    return %arg0, %c0_i32 : i32, i32
  }
  func.func @transform_1(%arg0: i32) -> (i32, i32) {
    %c0_i32 = arith.constant 0 : i32
    %c0_i32_0 = arith.constant 0 : i32
    %c0_i32_1 = arith.constant 0 : i32
    return %c0_i32, %c0_i32_0 : i32, i32
  }
  func.func @transform_2(%arg0: i32) -> (i32, i32) {
    %c0_i32 = arith.constant 0 : i32
    %c0_i32_0 = arith.constant 0 : i32
    %c0_i32_1 = arith.constant 0 : i32
    return %c0_i32, %c0_i32_0 : i32, i32
  }
  func.func @transform_3(%arg0: i32) -> (i32, i32) {
    %c0_i32 = arith.constant 0 : i32
    %c0_i32_0 = arith.constant 0 : i32
    %c0_i32_1 = arith.constant 0 : i32
    return %c0_i32, %c0_i32_0 : i32, i32
  }
  func.func @transform_4(%arg0: i32) -> (i32, i32) {
    %c0_i32 = arith.constant 0 : i32
    %c0_i32_0 = arith.constant 0 : i32
    %c0_i32_1 = arith.constant 0 : i32
    return %c0_i32, %c0_i32_0 : i32, i32
  }
  func.func @transform_5(%arg0: i32) -> (i32, i32) {
    %c0_i32 = arith.constant 0 : i32
    %c0_i32_0 = arith.constant 0 : i32
    %c0_i32_1 = arith.constant 0 : i32
    return %c0_i32, %c0_i32_0 : i32, i32
  }
  func.func @transform_6(%arg0: i32) -> (i32, i32) {
    %c0_i32 = arith.constant 0 : i32
    %c0_i32_0 = arith.constant 0 : i32
    %c0_i32_1 = arith.constant 0 : i32
    return %c0_i32, %c0_i32_0 : i32, i32
  }
  func.func @transform_7(%arg0: i32) -> (i32, i32) {
    %c0_i32 = arith.constant 0 : i32
    %c0_i32_0 = arith.constant 0 : i32
    %c0_i32_1 = arith.constant 0 : i32
    return %c0_i32, %c0_i32_0 : i32, i32
  }
  func.func @transform_8(%arg0: i32) -> (i32, i32) {
    %c0_i32 = arith.constant 0 : i32
    %c0_i32_0 = arith.constant 0 : i32
    %c0_i32_1 = arith.constant 0 : i32
    return %c0_i32, %c0_i32_0 : i32, i32
  }
  func.func @transform_9(%arg0: i32) -> (i32, i32) {
    %c0_i32 = arith.constant 0 : i32
    %c0_i32_0 = arith.constant 0 : i32
    return %c0_i32, %arg0 : i32, i32
  }
}

</mosaic_0001>

<llo_original>
// kernel: nnet_forward.1
$region0: #{nnet_forward.1}
  #allocation0 [shape = 'u32[]', space=smem, size = 0x4, offset = 0x4, fixed_abs, tag = 'smem constant byte address 0x4 - core index']
  #allocation1 [shape = 'u32[144,128]{1,0:T(1,128)}', space=vmem, size = 0x12000, scoped, tag = 'internal scratch']
  #allocation2 [shape = 'f32[1,1]{1,0:T(1,128)S(1)}', space=vmem, size = 0x200, scoped, tag = 'scoped memory for nnet_forward.1']
  %s0 = inlined_call_operand.vmem [shape: f32[8,25], index: 0, kind: input, shape index: {}]
  %s1 = inlined_call_operand.vmem [shape: bf16[50,25], index: 1, kind: input, shape index: {}]
  %s2 = inlined_call_operand.vmem [shape: f32[50,1], index: 2, kind: input, shape index: {}]
  %s3 = inlined_call_operand.vmem [shape: bf16[50,50], index: 3, kind: input, shape index: {}]
  %s4 = inlined_call_operand.vmem [shape: f32[50,1], index: 4, kind: input, shape index: {}]
  %s5 = inlined_call_operand.vmem [shape: bf16[25,50], index: 5, kind: input, shape index: {}]
  %s6 = inlined_call_operand.vmem [shape: f32[25,1], index: 6, kind: input, shape index: {}]
  %s7 = inlined_call_operand.vmem [shape: f32[25,1], index: 7, kind: input, shape index: {}]
  %s8 = inlined_call_operand.<no memory space> [shape: f32[1,1], index: 8, kind: input, shape index: {}]
  %s9 = inlined_call_operand.hbm [shape: f32[1,8], index: 9, kind: output, shape index: {}]
  %s10 = sld [smem:[#allocation0]]
  $region46: #{nnet_forward.1} parent=0
    _
  %s12 = ssub.s32 1, %s10
  %s13 = scalar_select 0, %s12, %s10
  %v14 = vstv %s8
  %15 = vst [vmem:[#allocation2] sm:$0x1] %v14
  $region1: #{nnet_forward.1} parent=0
    #allocation3 [shape = 'u8[512]{0}', space=vmem, size = 0x400, scoped, tag = 'output window, operand 0, single buffered']
    #allocation4 [shape = 's32[1]{0}', space=sflag, size = 0x4, scoped, tag = 'scoped memory for nnet_forward.1']
    %16 = vsyncpa [#allocation4], 0
    // Predicated region
    $region2: #{nnet_forward.1} parent=1 // pred_check
      _
    $region3: #{nnet_forward.1} parent=1 // pred_check_branch
      %18 = sbr.rel (0) target = $region5
    $region4: #{nnet_forward.1} parent=1 // pred_region
      _
    $region5: #{nnet_forward.1} parent=1 // pred_fallthru
      _
    // Predicated region
    $region6: #{nnet_forward.1} parent=1 // pred_check
      _
    $region7: #{nnet_forward.1} parent=1 // pred_check_branch
      %20 = sbr.rel (0) target = $region9
    $region8: #{nnet_forward.1} parent=1 // pred_region
      _
    $region9: #{nnet_forward.1} parent=1 // pred_fallthru
      _
    // Predicated region
    $region10: #{nnet_forward.1} parent=1 // pred_check
      _
    $region11: #{nnet_forward.1} parent=1 // pred_check_branch
      %22 = sbr.rel (0) target = $region13
    $region12: #{nnet_forward.1} parent=1 // pred_region
      _
    $region13: #{nnet_forward.1} parent=1 // pred_fallthru
      _
    // Predicated region
    $region14: #{nnet_forward.1} parent=1 // pred_check
      _
    $region15: #{nnet_forward.1} parent=1 // pred_check_branch
      %24 = sbr.rel (0) target = $region17
    $region16: #{nnet_forward.1} parent=1 // pred_region
      _
    $region17: #{nnet_forward.1} parent=1 // pred_fallthru
      _
    // Predicated region
    $region18: #{nnet_forward.1} parent=1 // pred_check
      _
    $region19: #{nnet_forward.1} parent=1 // pred_check_branch
      %26 = sbr.rel (0) target = $region21
    $region20: #{nnet_forward.1} parent=1 // pred_region
      _
    $region21: #{nnet_forward.1} parent=1 // pred_fallthru
      _
    // Predicated region
    $region22: #{nnet_forward.1} parent=1 // pred_check
      _
    $region23: #{nnet_forward.1} parent=1 // pred_check_branch
      %28 = sbr.rel (0) target = $region25
    $region24: #{nnet_forward.1} parent=1 // pred_region
      _
    $region25: #{nnet_forward.1} parent=1 // pred_fallthru
      _
    // Predicated region
    $region26: #{nnet_forward.1} parent=1 // pred_check
      _
    $region27: #{nnet_forward.1} parent=1 // pred_check_branch
      %30 = sbr.rel (0) target = $region29
    $region28: #{nnet_forward.1} parent=1 // pred_region
      _
    $region29: #{nnet_forward.1} parent=1 // pred_fallthru
      _
    // Predicated region
    $region30: #{nnet_forward.1} parent=1 // pred_check
      _
    $region31: #{nnet_forward.1} parent=1 // pred_check_branch
      %32 = sbr.rel (0) target = $region33
    $region32: #{nnet_forward.1} parent=1 // pred_region
      _
    $region33: #{nnet_forward.1} parent=1 // pred_fallthru
      _
    // Predicated region
    $region34: #{nnet_forward.1} parent=1 // pred_check
      _
    $region35: #{nnet_forward.1} parent=1 // pred_check_branch
      %34 = sbr.rel (0) target = $region37
    $region36: #{nnet_forward.1} parent=1 // pred_region
      _
    $region37: #{nnet_forward.1} parent=1 // pred_fallthru
      _
    %v36 = vld [vmem:[%s0] sm:$0xff]
    %v37 = vld [vmem:[%s0 + $0x8] sm:$0xff]
    %v38 = vld [vmem:[%s0 + $0x10] sm:$0xff]
    %v39 = vld [vmem:[%s0 + $0x18] sm:$0xff]
    %v40 = vld [vmem:[%s0 + $0x20] sm:$0xff]
    %v41 = vld [vmem:[%s0 + $0x28] sm:$0xff]
    %v42 = vld [vmem:[%s0 + $0x30] sm:$0xff]
    %v43 = vld [vmem:[%s0 + $0x38] sm:$0xff]
    %v44 = vld [vmem:[%s0 + $0x40] sm:$0xff]
    %v45 = vld [vmem:[%s0 + $0x48] sm:$0xff]
    %v46 = vld [vmem:[%s0 + $0x50] sm:$0xff]
    %v47 = vld [vmem:[%s0 + $0x58] sm:$0xff]
    %v48 = vld [vmem:[%s0 + $0x60] sm:$0xff]
    %v49 = vld [vmem:[%s0 + $0x68] sm:$0xff]
    %v50 = vld [vmem:[%s0 + $0x70] sm:$0xff]
    %v51 = vld [vmem:[%s0 + $0x78] sm:$0xff]
    %v52 = vpack.c.bf16 %v37, %v36
    %v53 = vpack.c.bf16 %v39, %v38
    %v54 = vpack.c.bf16 %v41, %v40
    %v55 = vpack.c.bf16 %v43, %v42
    %v56 = vpack.c.bf16 %v45, %v44
    %v57 = vpack.c.bf16 %v47, %v46
    %v58 = vpack.c.bf16 %v49, %v48
    %v59 = vpack.c.bf16 %v51, %v50
    %v60 = vld [vmem:[%s1] sm:$0xf]
    %v61 = vld [vmem:[%s1 + $0x4] sm:$0xf]
    %v62 = vld [vmem:[%s1 + $0x8] sm:$0xf]
    %v63 = vld [vmem:[%s1 + $0xc] sm:$0xf]
    %v64 = vld [vmem:[%s1 + $0x10] sm:$0xf]
    %v65 = vld [vmem:[%s1 + $0x14] sm:$0xf]
    %v66 = vld [vmem:[%s1 + $0x18] sm:$0x1]
    %v67 = vld [vmem:[%s2] sm:$0xff]
    %v68 = vld [vmem:[%s2 + $0x8] sm:$0xff]
    %v69 = vld [vmem:[%s2 + $0x10] sm:$0xff]
    %v70 = vld [vmem:[%s2 + $0x18] sm:$0xff]
    %v71 = vld [vmem:[%s2 + $0x20] sm:$0xff]
    %v72 = vld [vmem:[%s2 + $0x28] sm:$0xff]
    %v73 = vld [vmem:[%s2 + $0x30] sm:$0x3]
    %75 = vset.pattern.permute.xlu0 0
    %76 = vperm.xlu0 %75, %v67
    %v77 = vpop.permute.xlu0 %76
    %80 = vset.pattern.permute.xlu0 0
    %81 = vperm.xlu0 %80, %v68
    %v82 = vpop.permute.xlu0 %81
    %85 = vset.pattern.permute.xlu0 0
    %86 = vperm.xlu0 %85, %v69
    %v87 = vpop.permute.xlu0 %86
    %90 = vset.pattern.permute.xlu0 0
    %91 = vperm.xlu0 %90, %v70
    %v92 = vpop.permute.xlu0 %91
    %95 = vset.pattern.permute.xlu0 0
    %96 = vperm.xlu0 %95, %v71
    %v97 = vpop.permute.xlu0 %96
    %100 = vset.pattern.permute.xlu0 0
    %101 = vperm.xlu0 %100, %v72
    %v102 = vpop.permute.xlu0 %101
    %105 = vset.pattern.permute.xlu0 0
    %106 = vperm.xlu0 %105, %v73
    %v107 = vpop.permute.xlu0 %106
    %v116 = vunpack.c.l.b16 %v60
    %v117 = vunpack.c.l.b16 %v61
    %v118 = vunpack.c.l.b16 %v62
    %v119 = vunpack.c.l.b16 %v63
    %v120 = vunpack.c.l.b16 %v64
    %v121 = vunpack.c.l.b16 %v65
    %v122 = vunpack.c.l.b16 %v66
    %v123 = vpack.c.b16 %v117, %v116
    %v124 = vpack.c.b16 %v119, %v118
    %v125 = vpack.c.b16 %v121, %v120
    %v126 = vpack.c.b16 %v122, %v122
    %vm127 = vcmask 203776
    %v129 = vsel %vm127, %v123, 0
    %v132 = vsel %vm127, %v124, 0
    %v135 = vsel %vm127, %v125, 0
    %v138 = vsel %vm127, %v126, 0
    %v141 = vsel %vm127, %v52, 0
    %v144 = vsel %vm127, %v53, 0
    %v147 = vsel %vm127, %v54, 0
    %v150 = vsel %vm127, %v55, 0
    %v153 = vsel %vm127, %v56, 0
    %v156 = vsel %vm127, %v57, 0
    %v159 = vsel %vm127, %v58, 0
    %v162 = vsel %vm127, %v59, 0
    %164 = vmatprep.subr.bf16.mxu0 0
    %165 = vmatpush1.bf16.xpose.msra.mxu0 %v162
    %166 = vmatprep.subr.bf16.mxu0 0
    %167 = vmatpush1.bf16.xpose.msra.mxu0 %v159
    %168 = vmatprep.subr.bf16.mxu0 0
    %169 = vmatpush1.bf16.xpose.msra.mxu0 %v156
    %170 = vmatprep.subr.bf16.mxu0 0
    %171 = vmatpush1.bf16.xpose.msra.mxu0 %v153
    %172 = vmatprep.subr.bf16.mxu0 0
    %173 = vmatpush1.bf16.xpose.msra.mxu0 %v150
    %174 = vmatprep.subr.bf16.mxu0 0
    %175 = vmatpush1.bf16.xpose.msra.mxu0 %v147
    %176 = vmatprep.subr.bf16.mxu0 0
    %177 = vmatpush1.bf16.xpose.msra.mxu0 %v144
    %178 = vmatprep.subr.bf16.mxu0 0
    %179 = vmatpush1.bf16.xpose.msra.mxu0 %v141
    %180 = vmatprep.subr.bf16.mxu0 0
    %181 = vmatpush2.bf16.xpose.msra.mxu0 0
    %182 = vmatprep.subr.bf16.mxu0 0
    %183 = vmatpush2.bf16.xpose.msra.mxu0 0
    %184 = vmatprep.subr.bf16.mxu0 0
    %185 = vmatpush2.bf16.xpose.msra.mxu0 0
    %186 = vmatprep.subr.bf16.mxu0 0
    %187 = vmatpush2.bf16.xpose.msra.mxu0 0
    %188 = vmatprep.subr.bf16.mxu0 0
    %189 = vmatpush2.bf16.xpose.msra.mxu0 0
    %190 = vmatprep.subr.bf16.mxu0 0
    %191 = vmatpush2.bf16.xpose.msra.mxu0 0
    %192 = vmatprep.subr.bf16.mxu0 0
    %193 = vmatpush2.bf16.xpose.msra.mxu0 0
    %194 = vmatprep.subr.bf16.mxu0 0
    %195 = vmatpush2.bf16.xpose.msra.mxu0 0
    %196 = vmatprep.mubr.bf16.mxu0 0
    %197 = vmatmul.mubr.bf16.gmra.mxu0 %v129
    %v198 = vpop.f32.mrf.mxu0
    %v199 = vadd.f32 %v77, %v198
    %v200 = vpop.f32.mrf.mxu0
    %v201 = vpop.f32.mrf.mxu0
    %v202 = vadd.f32 %v82, %v201
    %v203 = vpop.f32.mrf.mxu0
    %204 = vmatprep.mubr.bf16.mxu0 0
    %205 = vmatmul.mubr.bf16.gmra.mxu0 %v132
    %v206 = vpop.f32.mrf.mxu0
    %v207 = vadd.f32 %v87, %v206
    %v208 = vpop.f32.mrf.mxu0
    %v209 = vpop.f32.mrf.mxu0
    %v210 = vadd.f32 %v92, %v209
    %v211 = vpop.f32.mrf.mxu0
    %212 = vmatprep.mubr.bf16.mxu0 0
    %213 = vmatmul.mubr.bf16.gmra.mxu0 %v135
    %v214 = vpop.f32.mrf.mxu0
    %v215 = vadd.f32 %v97, %v214
    %v216 = vpop.f32.mrf.mxu0
    %v217 = vpop.f32.mrf.mxu0
    %v218 = vadd.f32 %v102, %v217
    %v219 = vpop.f32.mrf.mxu0
    %220 = vmatprep.mubr.bf16.mxu0 0
    %221 = vmatmul.mubr.bf16.gmra.mxu0 %v138
    %v222 = vpop.f32.mrf.mxu0
    %v223 = vadd.f32 %v107, %v222
    %v224 = vpop.f32.mrf.mxu0
    %v225 = vpop.f32.mrf.mxu0
    %v226 = vpop.f32.mrf.mxu0
    %227 = vdwg.mxu0
    %v228 = vmax.f32 %v199, 0.0
    %v229 = vmax.f32 %v202, 0.0
    %v230 = vmax.f32 %v207, 0.0
    %v231 = vmax.f32 %v210, 0.0
    %v232 = vmax.f32 %v215, 0.0
    %v233 = vmax.f32 %v218, 0.0
    %v234 = vmax.f32 %v223, 0.0
    %v235 = vpack.c.bf16 %v229, %v228
    %v236 = vpack.c.bf16 %v231, %v230
    %v237 = vpack.c.bf16 %v233, %v232
    %v238 = vpack.c.bf16 %v234, %v234
    %v239 = vld [vmem:[%s3] sm:$0xf]
    %v240 = vld [vmem:[%s3 + $0x4] sm:$0xf]
    %v241 = vld [vmem:[%s3 + $0x8] sm:$0xf]
    %v242 = vld [vmem:[%s3 + $0xc] sm:$0xf]
    %v243 = vld [vmem:[%s3 + $0x10] sm:$0xf]
    %v244 = vld [vmem:[%s3 + $0x14] sm:$0xf]
    %v245 = vld [vmem:[%s3 + $0x18] sm:$0x1]
    %v246 = vld [vmem:[%s4] sm:$0xff]
    %v247 = vld [vmem:[%s4 + $0x8] sm:$0xff]
    %v248 = vld [vmem:[%s4 + $0x10] sm:$0xff]
    %v249 = vld [vmem:[%s4 + $0x18] sm:$0xff]
    %v250 = vld [vmem:[%s4 + $0x20] sm:$0xff]
    %v251 = vld [vmem:[%s4 + $0x28] sm:$0xff]
    %v252 = vld [vmem:[%s4 + $0x30] sm:$0x3]
    %254 = vset.pattern.permute.xlu0 0
    %255 = vperm.xlu0 %254, %v246
    %v256 = vpop.permute.xlu0 %255
    %259 = vset.pattern.permute.xlu0 0
    %260 = vperm.xlu0 %259, %v247
    %v261 = vpop.permute.xlu0 %260
    %264 = vset.pattern.permute.xlu0 0
    %265 = vperm.xlu0 %264, %v248
    %v266 = vpop.permute.xlu0 %265
    %269 = vset.pattern.permute.xlu0 0
    %270 = vperm.xlu0 %269, %v249
    %v271 = vpop.permute.xlu0 %270
    %274 = vset.pattern.permute.xlu0 0
    %275 = vperm.xlu0 %274, %v250
    %v276 = vpop.permute.xlu0 %275
    %279 = vset.pattern.permute.xlu0 0
    %280 = vperm.xlu0 %279, %v251
    %v281 = vpop.permute.xlu0 %280
    %284 = vset.pattern.permute.xlu0 0
    %285 = vperm.xlu0 %284, %v252
    %v286 = vpop.permute.xlu0 %285
    %v295 = vunpack.c.l.b16 %v239
    %v296 = vunpack.c.l.b16 %v240
    %v297 = vunpack.c.l.b16 %v241
    %v298 = vunpack.c.l.b16 %v242
    %v299 = vunpack.c.l.b16 %v243
    %v300 = vunpack.c.l.b16 %v244
    %v301 = vunpack.c.l.b16 %v245
    %v302 = vpack.c.b16 %v296, %v295
    %v303 = vpack.c.b16 %v298, %v297
    %v304 = vpack.c.b16 %v300, %v299
    %v305 = vpack.c.b16 %v301, %v301
    %vm306 = vcmask 408576
    %v308 = vsel %vm306, %v302, 0
    %v311 = vsel %vm306, %v303, 0
    %v314 = vsel %vm306, %v304, 0
    %v317 = vsel %vm306, %v305, 0
    %vm319 = vcmask 1040384
    %v321 = vsel %vm319, %v238, 0
    %323 = vmatprep.subr.bf16.mxu0 0
    %324 = vmatpush1.bf16.msra.mxu0 0
    %325 = vmatprep.subr.bf16.mxu0 0
    %326 = vmatpush1.bf16.msra.mxu0 0
    %327 = vmatprep.subr.bf16.mxu0 0
    %328 = vmatpush1.bf16.msra.mxu0 0
    %329 = vmatprep.subr.bf16.mxu0 0
    %330 = vmatpush1.bf16.msra.mxu0 0
    %331 = vmatprep.subr.bf16.mxu0 0
    %332 = vmatpush1.bf16.msra.mxu0 %v321
    %333 = vmatprep.subr.bf16.mxu0 0
    %334 = vmatpush1.bf16.msra.mxu0 %v237
    %335 = vmatprep.subr.bf16.mxu0 0
    %336 = vmatpush1.bf16.msra.mxu0 %v236
    %337 = vmatprep.subr.bf16.mxu0 0
    %338 = vmatpush1.bf16.msra.mxu0 %v235
    %339 = vmatprep.subr.bf16.mxu0 0
    %340 = vmatpush2.bf16.msra.mxu0 0
    %341 = vmatprep.subr.bf16.mxu0 0
    %342 = vmatpush2.bf16.msra.mxu0 0
    %343 = vmatprep.subr.bf16.mxu0 0
    %344 = vmatpush2.bf16.msra.mxu0 0
    %345 = vmatprep.subr.bf16.mxu0 0
    %346 = vmatpush2.bf16.msra.mxu0 0
    %347 = vmatprep.subr.bf16.mxu0 0
    %348 = vmatpush2.bf16.msra.mxu0 0
    %349 = vmatprep.subr.bf16.mxu0 0
    %350 = vmatpush2.bf16.msra.mxu0 0
    %351 = vmatprep.subr.bf16.mxu0 0
    %352 = vmatpush2.bf16.msra.mxu0 0
    %353 = vmatprep.subr.bf16.mxu0 0
    %354 = vmatpush2.bf16.msra.mxu0 0
    %355 = vmatprep.mubr.bf16.mxu0 0
    %356 = vmatmul.mubr.bf16.gmra.mxu0 %v308
    %v357 = vpop.f32.mrf.mxu0
    %v358 = vadd.f32 %v256, %v357
    %v359 = vpop.f32.mrf.mxu0
    %v360 = vpop.f32.mrf.mxu0
    %v361 = vadd.f32 %v261, %v360
    %v362 = vpop.f32.mrf.mxu0
    %363 = vmatprep.mubr.bf16.mxu0 0
    %364 = vmatmul.mubr.bf16.gmra.mxu0 %v311
    %v365 = vpop.f32.mrf.mxu0
    %v366 = vadd.f32 %v266, %v365
    %v367 = vpop.f32.mrf.mxu0
    %v368 = vpop.f32.mrf.mxu0
    %v369 = vadd.f32 %v271, %v368
    %v370 = vpop.f32.mrf.mxu0
    %371 = vmatprep.mubr.bf16.mxu0 0
    %372 = vmatmul.mubr.bf16.gmra.mxu0 %v314
    %v373 = vpop.f32.mrf.mxu0
    %v374 = vadd.f32 %v276, %v373
    %v375 = vpop.f32.mrf.mxu0
    %v376 = vpop.f32.mrf.mxu0
    %v377 = vadd.f32 %v281, %v376
    %v378 = vpop.f32.mrf.mxu0
    %379 = vmatprep.mubr.bf16.mxu0 0
    %380 = vmatmul.mubr.bf16.gmra.mxu0 %v317
    %v381 = vpop.f32.mrf.mxu0
    %v382 = vadd.f32 %v286, %v381
    %v383 = vpop.f32.mrf.mxu0
    %v384 = vpop.f32.mrf.mxu0
    %v385 = vpop.f32.mrf.mxu0
    %386 = vdwg.mxu0
    %v387 = vmax.f32 %v358, 0.0
    %v388 = vmax.f32 %v361, 0.0
    %v389 = vmax.f32 %v366, 0.0
    %v390 = vmax.f32 %v369, 0.0
    %v391 = vmax.f32 %v374, 0.0
    %v392 = vmax.f32 %v377, 0.0
    %v393 = vmax.f32 %v382, 0.0
    %v394 = vpack.c.bf16 %v388, %v387
    %v395 = vpack.c.bf16 %v390, %v389
    %v396 = vpack.c.bf16 %v392, %v391
    %v397 = vpack.c.bf16 %v393, %v393
    %v398 = vld [vmem:[%s5] sm:$0xf]
    %v399 = vld [vmem:[%s5 + $0x4] sm:$0xf]
    %v400 = vld [vmem:[%s5 + $0x8] sm:$0xf]
    %v401 = vld [vmem:[%s5 + $0xc] sm:$0x1]
    %v402 = vld [vmem:[%s6] sm:$0xff]
    %v403 = vld [vmem:[%s6 + $0x8] sm:$0xff]
    %v404 = vld [vmem:[%s6 + $0x10] sm:$0xff]
    %v405 = vld [vmem:[%s6 + $0x18] sm:$0x1]
    %407 = vset.pattern.permute.xlu0 0
    %408 = vperm.xlu0 %407, %v402
    %v409 = vpop.permute.xlu0 %408
    %412 = vset.pattern.permute.xlu0 0
    %413 = vperm.xlu0 %412, %v403
    %v414 = vpop.permute.xlu0 %413
    %417 = vset.pattern.permute.xlu0 0
    %418 = vperm.xlu0 %417, %v404
    %v419 = vpop.permute.xlu0 %418
    %422 = vset.pattern.permute.xlu0 0
    %423 = vperm.xlu0 %422, %v405
    %v424 = vpop.permute.xlu0 %423
    %v430 = vunpack.c.l.b16 %v398
    %v431 = vunpack.c.l.b16 %v399
    %v432 = vunpack.c.l.b16 %v400
    %v433 = vunpack.c.l.b16 %v401
    %v434 = vpack.c.b16 %v431, %v430
    %v435 = vpack.c.b16 %v433, %v432
    %v437 = vsel %vm306, %v434, 0
    %v440 = vsel %vm306, %v435, 0
    %v443 = vsel %vm319, %v397, 0
    %445 = vmatprep.subr.bf16.mxu0 0
    %446 = vmatpush1.bf16.msra.mxu0 0
    %447 = vmatprep.subr.bf16.mxu0 0
    %448 = vmatpush1.bf16.msra.mxu0 0
    %449 = vmatprep.subr.bf16.mxu0 0
    %450 = vmatpush1.bf16.msra.mxu0 0
    %451 = vmatprep.subr.bf16.mxu0 0
    %452 = vmatpush1.bf16.msra.mxu0 0
    %453 = vmatprep.subr.bf16.mxu0 0
    %454 = vmatpush1.bf16.msra.mxu0 %v443
    %455 = vmatprep.subr.bf16.mxu0 0
    %456 = vmatpush1.bf16.msra.mxu0 %v396
    %457 = vmatprep.subr.bf16.mxu0 0
    %458 = vmatpush1.bf16.msra.mxu0 %v395
    %459 = vmatprep.subr.bf16.mxu0 0
    %460 = vmatpush1.bf16.msra.mxu0 %v394
    %461 = vmatprep.subr.bf16.mxu0 0
    %462 = vmatpush2.bf16.msra.mxu0 0
    %463 = vmatprep.subr.bf16.mxu0 0
    %464 = vmatpush2.bf16.msra.mxu0 0
    %465 = vmatprep.subr.bf16.mxu0 0
    %466 = vmatpush2.bf16.msra.mxu0 0
    %467 = vmatprep.subr.bf16.mxu0 0
    %468 = vmatpush2.bf16.msra.mxu0 0
    %469 = vmatprep.subr.bf16.mxu0 0
    %470 = vmatpush2.bf16.msra.mxu0 0
    %471 = vmatprep.subr.bf16.mxu0 0
    %472 = vmatpush2.bf16.msra.mxu0 0
    %473 = vmatprep.subr.bf16.mxu0 0
    %474 = vmatpush2.bf16.msra.mxu0 0
    %475 = vmatprep.subr.bf16.mxu0 0
    %476 = vmatpush2.bf16.msra.mxu0 0
    %477 = vmatprep.mubr.bf16.mxu0 0
    %478 = vmatmul.mubr.bf16.gmra.mxu0 %v437
    %v479 = vpop.f32.mrf.mxu0
    %v480 = vadd.f32 %v409, %v479
    %v481 = vpop.f32.mrf.mxu0
    %v482 = vpop.f32.mrf.mxu0
    %v483 = vadd.f32 %v414, %v482
    %v484 = vpop.f32.mrf.mxu0
    %485 = vmatprep.mubr.bf16.mxu0 0
    %486 = vmatmul.mubr.bf16.gmra.mxu0 %v440
    %v487 = vpop.f32.mrf.mxu0
    %v488 = vadd.f32 %v419, %v487
    %v489 = vpop.f32.mrf.mxu0
    %v490 = vpop.f32.mrf.mxu0
    %v491 = vadd.f32 %v424, %v490
    %v492 = vpop.f32.mrf.mxu0
    %493 = vdwg.mxu0
    %v494 = vmax.f32 %v480, 0.0
    %v495 = vmax.f32 %v483, 0.0
    %v496 = vmax.f32 %v488, 0.0
    %v497 = vmax.f32 %v491, 0.0
    %v498 = vld [vmem:[%s7] sm:$0xff]
    %v499 = vld [vmem:[%s7 + $0x8] sm:$0xff]
    %v500 = vld [vmem:[%s7 + $0x10] sm:$0xff]
    %v501 = vld [vmem:[%s7 + $0x18] sm:$0x1]
    %503 = vset.pattern.permute.xlu0 0
    %504 = vperm.xlu0 %503, %v498
    %v505 = vpop.permute.xlu0 %504
    %508 = vset.pattern.permute.xlu0 0
    %509 = vperm.xlu0 %508, %v499
    %v510 = vpop.permute.xlu0 %509
    %513 = vset.pattern.permute.xlu0 0
    %514 = vperm.xlu0 %513, %v500
    %v515 = vpop.permute.xlu0 %514
    %518 = vset.pattern.permute.xlu0 0
    %519 = vperm.xlu0 %518, %v501
    %v520 = vpop.permute.xlu0 %519
    %v522 = vmul.f32 %v494, %v505
    %v523 = vmul.f32 %v495, %v510
    %v524 = vmul.f32 %v496, %v515
    %v525 = vmul.f32 %v497, %v520
    %v526 = vadd.f32 %v522, %v523
    %v527 = vadd.f32 %v526, %v524
    %v528 = vsel %vm319, %v525, 0.0
    %v529 = vadd.f32 %v527, %v528
    %v530 = vrot.slane %v529, 4
    %v531 = vadd.f32 %v529, %v530
    %v532 = vrot.slane %v531, 2
    %v533 = vadd.f32 %v531, %v532
    %v534 = vrot.slane %v533, 1
    %v535 = vadd.f32 %v533, %v534
    %v536 = vld [vmem:[#allocation2] sm:$0x1]
    %538 = vset.pattern.permute.xlu0 0
    %539 = vperm.xlu0 %538, %v536
    %v540 = vpop.permute.xlu0 %539
    %v542 = vlaneseq
    %v543 = vshrl.u32 %v542, 7
    %v544 = vsub.s32 0, %v543
    %v545 = vrot.slane %v540, %v544
    %v546 = vadd.f32 %v535, %v545
    %v547 = vsub.f32 0.0, %v546
    %v548 = vmul.f32 %v547, 1.442695
    %v549 = vpow.pop %v548
    %v550 = vadd.f32 %v549, 1.0
    %v551 = vrcp.pop %v550
    %v552 = vmul.f32 1.0, %v551
    %553 = vst [vmem:[#allocation3] sm:$0x1] %v552
    // Predicated region
    $region38: #{nnet_forward.1} parent=1 // pred_check
      _
    $region39: #{nnet_forward.1} parent=1 // pred_check_branch
      %555 = sbr.rel (0) target = $region41
    $region40: #{nnet_forward.1} parent=1 // pred_region
      %s557 = ssub.s32 16, 16
      %558 = vsyncadd [#allocation4], %s557
      %s560 = sshll.u32 [#allocation3], 4
      %s561 = int_to_ptr.vmem [resolvable:$true] %s560
      %563 = dma.vmem_to_hbm [thread:$0]  %s561, 16, %s9, [#allocation4]
    $region41: #{nnet_forward.1} parent=1 // pred_fallthru
      _
    // Predicated region
    $region42: #{nnet_forward.1} parent=1 // pred_check
      _
    $region43: #{nnet_forward.1} parent=1 // pred_check_branch
      %565 = sbr.rel (0) target = $region45
    $region44: #{nnet_forward.1} parent=1 // pred_region
      %566 = dma.done [#allocation4], 16
    $region45: #{nnet_forward.1} parent=1 // pred_fallthru
      _
    %567 = vsyncpa [#allocation4], 1

</llo_original>
